<compile_context>
chip_gen: v7x
topology: tpu7x:2x2x1
jax: 0.10.0
libtpu: 0.0.40
codegen_flags: <defaults>
</compile_context>

<pallas_src>
import jax
import jax.numpy as jnp
from jax.experimental import pallas as pl
from jax.experimental.pallas import tpu as pltpu

EPS = 1e-5
_VMEM_LIMIT_BYTES = 32 * 1024 * 1024      # scoped VMEM limit (safe on v5e/v6e/v7x)
_BLOCK_BUDGET_BYTES = 16 * 1024 * 1024    # budget for double-buffered in+out blocks


def bn_kernel(gamma_ref, beta_ref, x_ref, o_ref):
    # One grid step == one tile of channels.  x_ref block: (B, Ctile, D2, F, HW).
    c_tile = x_ref.shape[1]
    c0 = pl.program_id(0) * c_tile
    for j in range(c_tile):                    # static unroll over the channel tile
        x = x_ref[:, j]                        # (B, D2, F, HW) f32
        m = jnp.mean(x, axis=1)                # mean over D2 -> (B, F, HW): VPU adds
        mu = jnp.mean(m)                       # batch mean over (B*F, H, W)
        var = jnp.mean((m - mu) ** 2)          # biased batch var (training mode)
        scale = gamma_ref[c0 + j] * jax.lax.rsqrt(var + EPS)   # rsqrt -> EUP
        shift = beta_ref[c0 + j] - mu * scale
        o_ref[:, j] = m * scale + shift        # 2 VPU ops / element, lane-dense store


def _choose_c_tile(B, C, D2, F, HW):
    # Bytes per channel per grid step: input slab + output slab, double-buffered.
    per_chan = 2 * 4 * B * F * HW * (D2 + 1)
    # TODO(synk): if even a single channel exceeds the VMEM budget (very large
    # B*H*W), switch to a two-pass scheme tiling N with sum/sumsq accumulation
    # over an "arbitrary" grid axis.
    divisors = [d for d in range(1, C + 1) if C % d == 0]
    fits = [d for d in divisors if d * per_chan <= _BLOCK_BUDGET_BYTES] or [1]
    multi = [d for d in fits if C // d >= 2]   # keep >= 2 grid steps for megacore
    return max(multi) if multi else max(fits)


def batchnorm_forward(x, gamma, beta):
    """x: (B, C, D2, F=5, H, W) float32 -> (B, C, 1, F, H, W) float32."""
    B, C, D2, F, H, W = x.shape
    assert F == 5, "torch unflatten(0, (-1, 5)) requires the 4th dim to be 5"
    HW = H * W

    c_tile = _choose_c_tile(B, C, D2, F, HW)
    xk = x.reshape(B, C, D2, F, HW)            # metadata-only reshape (no transpose)

    out = pl.pallas_call(
        bn_kernel,
        out_shape=jax.ShapeDtypeStruct((B, C, F, HW), jnp.float32),
        grid=(C // c_tile,),
        in_specs=[
            pl.BlockSpec(memory_space=pltpu.MemorySpace.SMEM),   # gamma (C,)
            pl.BlockSpec(memory_space=pltpu.MemorySpace.SMEM),   # beta  (C,)
            pl.BlockSpec((B, c_tile, D2, F, HW), lambda c: (0, c, 0, 0, 0)),
        ],
        out_specs=pl.BlockSpec((B, c_tile, F, HW), lambda c: (0, c, 0, 0)),
        compiler_params=pltpu.CompilerParams(
            dimension_semantics=("parallel",),
            vmem_limit_bytes=_VMEM_LIMIT_BYTES),
    )(gamma, beta, xk)

    # (B, C, F, HW) -> (B, C, 1, F, H, W): metadata-only reshape (size-1 insert
    # + split of HW), no transpose.
    return out.reshape(B, C, 1, F, H, W)


def batchnorm_ref(x, gamma, beta):
    """Pure-JAX reference of the torch forward (training-mode BatchNorm2d)."""
    B, C, D2, F, H, W = x.shape
    xp = jnp.transpose(x, (0, 3, 1, 2, 4, 5))          # (B, F, C, D2, H, W)
    m = jnp.mean(xp, axis=3).reshape(B * F, C, H, W)   # (N, C, H, W)
    mu = jnp.mean(m, axis=(0, 2, 3), keepdims=True)
    var = jnp.mean((m - mu) ** 2, axis=(0, 2, 3), keepdims=True)
    y = (m - mu) / jnp.sqrt(var + EPS)
    y = y * gamma[None, :, None, None] + beta[None, :, None, None]
    y = y.reshape(B, F, C, 1, H, W)
    return jnp.transpose(y, (0, 2, 3, 1, 4, 5))        # (B, C, 1, F, H, W)


if __name__ == "__main__":
    key = jax.random.PRNGKey(0)
    kx, kg, kb = jax.random.split(key, 3)

    # H*W = 256 (multiple of 128) so output stores are lane-dense.
    B, C, D2, F, H, W = 2, 4, 3, 5, 16, 16
    x = jax.random.normal(kx, (B, C, D2, F, H, W), dtype=jnp.float32)
    # Deterministic affine params (torch default is ones/zeros; perturb so the
    # affine path is exercised).
    gamma = 1.0 + 0.1 * jax.random.normal(kg, (C,), dtype=jnp.float32)
    beta = 0.1 * jax.random.normal(kb, (C,), dtype=jnp.float32)

    y = jax.block_until_ready(batchnorm_forward(x, gamma, beta))
    y_ref = batchnorm_ref(x, gamma, beta)

    assert y.shape == (B, C, 1, F, H, W)
    assert jnp.allclose(y, y_ref, atol=1e-5, rtol=1e-5)
    print("KERNEL_OK")
</pallas_src>

<mosaic_0001>
module attributes {stable_mosaic.version = 11 : i64} {
  func.func @bn_kernel(%arg0: i32, %arg1: memref<4xf32, #tpu.memory_space<smem>>, %arg2: memref<4xf32, #tpu.memory_space<smem>>, %arg3: memref<2x2x3x5x256xf32, #tpu.memory_space<vmem>>, %arg4: memref<2x2x5x256xf32, #tpu.memory_space<vmem>>) attributes {dimension_semantics = [#tpu.dimension_semantics<parallel>], iteration_bounds = array<i64: 2>, scalar_prefetch = 0 : i64, scratch_operands = 0 : i64, tpu.core_type = #tpu.core_type<tc>, window_params = [{transform_indices = @transform_0, window_bounds = array<i64: 4>}, {transform_indices = @transform_1, window_bounds = array<i64: 4>}, {transform_indices = @transform_2, window_bounds = array<i64: 2, 2, 3, 5, 256>}, {transform_indices = @transform_3, window_bounds = array<i64: 2, 2, 5, 256>}]} {
    %c2_i32 = arith.constant 2 : i32
    %0 = arith.muli %arg0, %c2_i32 : i32
    %c0 = arith.constant 0 : index
    %c0_0 = arith.constant 0 : index
    %c0_1 = arith.constant 0 : index
    %c0_2 = arith.constant 0 : index
    %c0_3 = arith.constant 0 : index
    %1 = vector.load %arg3[%c0, %c0_0, %c0_1, %c0_2, %c0_3] : memref<2x2x3x5x256xf32, #tpu.memory_space<vmem>>, vector<2x1x3x5x256xf32>
    %2 = vector.shape_cast %1 : vector<2x1x3x5x256xf32> to vector<2x3x5x256xf32>
    %cst = arith.constant dense<0.000000e+00> : vector<2x5x256xf32>
    %3 = vector.multi_reduction <add>, %2, %cst [1] : vector<2x3x5x256xf32> to vector<2x5x256xf32>
    %cst_4 = arith.constant 3.000000e+00 : f32
    %4 = vector.broadcast %cst_4 : f32 to vector<2x5x256xf32>
    %5 = arith.divf %3, %4 : vector<2x5x256xf32>
    %6 = vector.shape_cast %5 : vector<2x5x256xf32> to vector<1x2x5x256xf32>
    %cst_5 = arith.constant dense<0.000000e+00> : vector<1xf32>
    %7 = vector.multi_reduction <add>, %6, %cst_5 [1, 2, 3] : vector<1x2x5x256xf32> to vector<1xf32>
    %8 = vector.shape_cast %7 : vector<1xf32> to vector<1x1x1x1xf32>
    %9 = vector.extract %8[0, 0, 0, 0] : f32 from vector<1x1x1x1xf32>
    %cst_6 = arith.constant 2.560000e+03 : f32
    %10 = arith.divf %9, %cst_6 : f32
    %11 = vector.broadcast %10 : f32 to vector<2x5x256xf32>
    %12 = arith.subf %5, %11 : vector<2x5x256xf32>
    %13 = arith.mulf %12, %12 : vector<2x5x256xf32>
    %14 = vector.shape_cast %13 : vector<2x5x256xf32> to vector<1x2x5x256xf32>
    %cst_7 = arith.constant dense<0.000000e+00> : vector<1xf32>
    %15 = vector.multi_reduction <add>, %14, %cst_7 [1, 2, 3] : vector<1x2x5x256xf32> to vector<1xf32>
    %16 = vector.shape_cast %15 : vector<1xf32> to vector<1x1x1x1xf32>
    %17 = vector.extract %16[0, 0, 0, 0] : f32 from vector<1x1x1x1xf32>
    %cst_8 = arith.constant 2.560000e+03 : f32
    %18 = arith.divf %17, %cst_8 : f32
    %c0_i32 = arith.constant 0 : i32
    %19 = arith.addi %0, %c0_i32 : i32
    %20 = arith.index_cast %19 : i32 to index
    %21 = memref.load %arg1[%20] : memref<4xf32, #tpu.memory_space<smem>>
    %cst_9 = arith.constant 9.99999974E-6 : f32
    %22 = arith.addf %18, %cst_9 : f32
    %23 = math.rsqrt %22 : f32
    %24 = arith.mulf %21, %23 : f32
    %c0_i32_10 = arith.constant 0 : i32
    %25 = arith.addi %0, %c0_i32_10 : i32
    %26 = arith.index_cast %25 : i32 to index
    %27 = memref.load %arg2[%26] : memref<4xf32, #tpu.memory_space<smem>>
    %28 = arith.mulf %10, %24 : f32
    %29 = arith.subf %27, %28 : f32
    %30 = vector.broadcast %24 : f32 to vector<2x5x256xf32>
    %31 = arith.mulf %5, %30 : vector<2x5x256xf32>
    %32 = vector.broadcast %29 : f32 to vector<2x5x256xf32>
    %33 = arith.addf %31, %32 : vector<2x5x256xf32>
    %c0_11 = arith.constant 0 : index
    %c0_12 = arith.constant 0 : index
    %c0_13 = arith.constant 0 : index
    %c0_14 = arith.constant 0 : index
    %34 = vector.load %arg4[%c0_11, %c0_12, %c0_13, %c0_14] : memref<2x2x5x256xf32, #tpu.memory_space<vmem>>, vector<2x1x5x256xf32>
    %35 = vector.shape_cast %34 : vector<2x1x5x256xf32> to vector<2x5x256xf32>
    %36 = vector.shape_cast %33 : vector<2x5x256xf32> to vector<2x1x5x256xf32>
    tpu.vector_store %arg4[%c0_11, %c0_12, %c0_13, %c0_14], %36 {strides = array<i32>} : memref<2x2x5x256xf32, #tpu.memory_space<vmem>>, vector<2x1x5x256xf32>,
    %c0_15 = arith.constant 0 : index
    %c1 = arith.constant 1 : index
    %c0_16 = arith.constant 0 : index
    %c0_17 = arith.constant 0 : index
    %c0_18 = arith.constant 0 : index
    %37 = vector.load %arg3[%c0_15, %c1, %c0_16, %c0_17, %c0_18] : memref<2x2x3x5x256xf32, #tpu.memory_space<vmem>>, vector<2x1x3x5x256xf32>
    %38 = vector.shape_cast %37 : vector<2x1x3x5x256xf32> to vector<2x3x5x256xf32>
    %cst_19 = arith.constant dense<0.000000e+00> : vector<2x5x256xf32>
    %39 = vector.multi_reduction <add>, %38, %cst_19 [1] : vector<2x3x5x256xf32> to vector<2x5x256xf32>
    %cst_20 = arith.constant 3.000000e+00 : f32
    %40 = vector.broadcast %cst_20 : f32 to vector<2x5x256xf32>
    %41 = arith.divf %39, %40 : vector<2x5x256xf32>
    %42 = vector.shape_cast %41 : vector<2x5x256xf32> to vector<1x2x5x256xf32>
    %cst_21 = arith.constant dense<0.000000e+00> : vector<1xf32>
    %43 = vector.multi_reduction <add>, %42, %cst_21 [1, 2, 3] : vector<1x2x5x256xf32> to vector<1xf32>
    %44 = vector.shape_cast %43 : vector<1xf32> to vector<1x1x1x1xf32>
    %45 = vector.extract %44[0, 0, 0, 0] : f32 from vector<1x1x1x1xf32>
    %cst_22 = arith.constant 2.560000e+03 : f32
    %46 = arith.divf %45, %cst_22 : f32
    %47 = vector.broadcast %46 : f32 to vector<2x5x256xf32>
    %48 = arith.subf %41, %47 : vector<2x5x256xf32>
    %49 = arith.mulf %48, %48 : vector<2x5x256xf32>
    %50 = vector.shape_cast %49 : vector<2x5x256xf32> to vector<1x2x5x256xf32>
    %cst_23 = arith.constant dense<0.000000e+00> : vector<1xf32>
    %51 = vector.multi_reduction <add>, %50, %cst_23 [1, 2, 3] : vector<1x2x5x256xf32> to vector<1xf32>
    %52 = vector.shape_cast %51 : vector<1xf32> to vector<1x1x1x1xf32>
    %53 = vector.extract %52[0, 0, 0, 0] : f32 from vector<1x1x1x1xf32>
    %cst_24 = arith.constant 2.560000e+03 : f32
    %54 = arith.divf %53, %cst_24 : f32
    %c1_i32 = arith.constant 1 : i32
    %55 = arith.addi %0, %c1_i32 : i32
    %56 = arith.index_cast %55 : i32 to index
    %57 = memref.load %arg1[%56] : memref<4xf32, #tpu.memory_space<smem>>
    %cst_25 = arith.constant 9.99999974E-6 : f32
    %58 = arith.addf %54, %cst_25 : f32
    %59 = math.rsqrt %58 : f32
    %60 = arith.mulf %57, %59 : f32
    %c1_i32_26 = arith.constant 1 : i32
    %61 = arith.addi %0, %c1_i32_26 : i32
    %62 = arith.index_cast %61 : i32 to index
    %63 = memref.load %arg2[%62] : memref<4xf32, #tpu.memory_space<smem>>
    %64 = arith.mulf %46, %60 : f32
    %65 = arith.subf %63, %64 : f32
    %66 = vector.broadcast %60 : f32 to vector<2x5x256xf32>
    %67 = arith.mulf %41, %66 : vector<2x5x256xf32>
    %68 = vector.broadcast %65 : f32 to vector<2x5x256xf32>
    %69 = arith.addf %67, %68 : vector<2x5x256xf32>
    %c0_27 = arith.constant 0 : index
    %c1_28 = arith.constant 1 : index
    %c0_29 = arith.constant 0 : index
    %c0_30 = arith.constant 0 : index
    %70 = vector.load %arg4[%c0_27, %c1_28, %c0_29, %c0_30] : memref<2x2x5x256xf32, #tpu.memory_space<vmem>>, vector<2x1x5x256xf32>
    %71 = vector.shape_cast %70 : vector<2x1x5x256xf32> to vector<2x5x256xf32>
    %72 = vector.shape_cast %69 : vector<2x5x256xf32> to vector<2x1x5x256xf32>
    tpu.vector_store %arg4[%c0_27, %c1_28, %c0_29, %c0_30], %72 {strides = array<i32>} : memref<2x2x5x256xf32, #tpu.memory_space<vmem>>, vector<2x1x5x256xf32>,
    return
  }
  func.func @transform_0(%arg0: i32) -> i32 {
    %c0_i32 = arith.constant 0 : i32
    %c0_i32_0 = arith.constant 0 : i32
    return %c0_i32 : i32
  }
  func.func @transform_1(%arg0: i32) -> i32 {
    %c0_i32 = arith.constant 0 : i32
    %c0_i32_0 = arith.constant 0 : i32
    return %c0_i32 : i32
  }
  func.func @transform_2(%arg0: i32) -> (i32, i32, i32, i32, i32) {
    %c0_i32 = arith.constant 0 : i32
    %c0_i32_0 = arith.constant 0 : i32
    %c0_i32_1 = arith.constant 0 : i32
    %c0_i32_2 = arith.constant 0 : i32
    %c0_i32_3 = arith.constant 0 : i32
    return %c0_i32, %arg0, %c0_i32_0, %c0_i32_1, %c0_i32_2 : i32, i32, i32, i32, i32
  }
  func.func @transform_3(%arg0: i32) -> (i32, i32, i32, i32) {
    %c0_i32 = arith.constant 0 : i32
    %c0_i32_0 = arith.constant 0 : i32
    %c0_i32_1 = arith.constant 0 : i32
    %c0_i32_2 = arith.constant 0 : i32
    return %c0_i32, %arg0, %c0_i32_0, %c0_i32_1 : i32, i32, i32, i32
  }
}

</mosaic_0001>

<llo_original>
// kernel: tpu_custom_call.1
$region0: #{tpu_custom_call.1}
  #allocation0 [shape = 'u32[]', space=smem, size = 0x4, offset = 0x4, fixed_abs, tag = 'smem constant byte address 0x4 - core index']
  #allocation1 [shape = 'u32[144,128]{1,0:T(1,128)}', space=vmem, size = 0x12000, scoped, tag = 'internal scratch']
  %s0 = inlined_call_operand.vmem [shape: f32[4], index: 0, kind: input, shape index: {}]
  %s1 = inlined_call_operand.vmem [shape: f32[4], index: 1, kind: input, shape index: {}]
  %s2 = inlined_call_operand.vmem [shape: f32[2,4,3,5,256], index: 2, kind: input, shape index: {}]
  %s3 = inlined_call_operand.vmem [shape: f32[2,4,5,256], index: 3, kind: output, shape index: {}]
  %s4 = sld [smem:[#allocation0]]
  $region95: #{tpu_custom_call.1} parent=0
    _
  %s6 = ssub.s32 1, %s4
  %s7 = scalar_select 0, %s6, %s4
  $region1: #{tpu_custom_call.1} parent=0
    #allocation2 [shape = 'u8[512]{0}', space=smem, size = 0x200, scoped, tag = 'input window, operand 0, single buffered']
    #allocation3 [shape = 's32[2]{0}', space=sflag, size = 0x8, scoped, tag = 'scoped memory for tpu_custom_call.1']
    #allocation4 [shape = 'u8[512]{0}', space=smem, size = 0x200, scoped, tag = 'input window, operand 1, single buffered']
    #allocation5 [shape = 's32[1]{0}', space=sflag, size = 0x4, scoped, tag = 'scoped memory for tpu_custom_call.1']
    #allocation6 [shape = 'u8[196608]{0}', space=vmem, size = 0x30000, scoped, tag = 'input window, operand 2']
    #allocation7 [shape = 'u8[65536]{0}', space=vmem, size = 0x10000, scoped, tag = 'output window, operand 0']
    %8 = vsyncpa [#allocation3], 0
    %9 = vsyncpa [#allocation5], 0
    loop: start=0, step=1, limit=4
    $region2: #{tpu_custom_call.1} parent=1 // loop_pre_header
      _
    $region3: #{tpu_custom_call.1} parent=1 // loop_header
      %s11 = sphi 0, %s15
      %p12 = scmp.ge.s32.totalorder %s11, 4
      %s19 = sphi 0, %s19
      %s21 = sphi 0, %s19
      %s22 = sphi 0, %s21
      %s36 = sphi 0, %s22
      %s40 = sphi 0, %s40
      %s42 = sphi 0, %s40
      %s43 = sphi 0, %s42
      %s57 = sphi 0, %s43
      %s63 = sphi 0, %s65
      %s66 = sphi 0, %s63
      %s67 = sphi 0, %s66
      %s83 = sphi 0, %s67
      %s89 = sphi 0, %s91
      %s92 = sphi 0, %s89
      %s93 = sphi 0, %s92
      %s109 = sphi 0, %s93
    $region4: #{tpu_custom_call.1} parent=1 // loop_header_branch
      %14 = sbr.rel (%p12) target = $region8
    $region5: #{tpu_custom_call.1} parent=1 // loop_body
      %s16 = ssub.s32 %s11, 1
      %s17 = ssub.s32 %s11, 2
      %s18 = sadd.s32 %s11, 1
      %s20 = sadd.s32 %s19, 1
      %p23 = scmp.eq.s32.totalorder %s11, 1
      %p24 = scmp.ne.s32.totalorder %s19, %s21
      %p25 = scmp.eq.s32.totalorder %s11, 0
      %p26 = por %p24, %p25
      %p27 = scmp.ne.s32.totalorder %s19, %s21
      %p28 = scmp.eq.s32.totalorder %s16, 1
      %p29 = por %p27, %p28
      %p30 = scmp.ne.s32.totalorder %s21, %s22
      %p31 = scmp.eq.s32.totalorder %s16, 0
      %p32 = por %p30, %p31
      %p33 = scmp.ne.s32.totalorder %s21, %s22
      %p34 = scmp.eq.s32.totalorder %s17, 1
      %p35 = por %p33, %p34
      %p37 = scmp.ne.s32.totalorder %s22, %s36
      %p38 = scmp.eq.s32.totalorder %s17, 0
      %p39 = por %p37, %p38
      %s41 = sadd.s32 %s40, 1
      %p44 = scmp.eq.s32.totalorder %s11, 1
      %p45 = scmp.ne.s32.totalorder %s40, %s42
      %p46 = scmp.eq.s32.totalorder %s11, 0
      %p47 = por %p45, %p46
      %p48 = scmp.ne.s32.totalorder %s40, %s42
      %p49 = scmp.eq.s32.totalorder %s16, 1
      %p50 = por %p48, %p49
      %p51 = scmp.ne.s32.totalorder %s42, %s43
      %p52 = scmp.eq.s32.totalorder %s16, 0
      %p53 = por %p51, %p52
      %p54 = scmp.ne.s32.totalorder %s42, %s43
      %p55 = scmp.eq.s32.totalorder %s17, 1
      %p56 = por %p54, %p55
      %p58 = scmp.ne.s32.totalorder %s43, %s57
      %p59 = scmp.eq.s32.totalorder %s17, 0
      %p60 = por %p58, %p59
      %s61 = ssub.s32 %s11, %s18
      %p62 = scmp.eq.s32.totalorder %s61, 0
      %s64 = sadd.s32 %s63, 1
      %s65 = scalar_select %p62, %s63, %s64
      %p68 = pneg %p62
      %p69 = scmp.eq.s32.totalorder %s11, 1
      %p70 = por %p68, %p69
      %p71 = scmp.ne.s32.totalorder %s63, %s66
      %p72 = scmp.eq.s32.totalorder %s11, 0
      %p73 = por %p71, %p72
      %p74 = scmp.ne.s32.totalorder %s63, %s66
      %p75 = scmp.eq.s32.totalorder %s16, 1
      %p76 = por %p74, %p75
      %p77 = scmp.ne.s32.totalorder %s66, %s67
      %p78 = scmp.eq.s32.totalorder %s16, 0
      %p79 = por %p77, %p78
      %p80 = scmp.ne.s32.totalorder %s66, %s67
      %p81 = scmp.eq.s32.totalorder %s17, 1
      %p82 = por %p80, %p81
      %p84 = scmp.ne.s32.totalorder %s67, %s83
      %p85 = scmp.eq.s32.totalorder %s17, 0
      %p86 = por %p84, %p85
      %s87 = ssub.s32 %s11, %s18
      %p88 = scmp.eq.s32.totalorder %s87, 0
      %s90 = sadd.s32 %s89, 1
      %s91 = scalar_select %p88, %s89, %s90
      %p94 = pneg %p88
      %p95 = scmp.eq.s32.totalorder %s11, 1
      %p96 = por %p94, %p95
      %p97 = scmp.ne.s32.totalorder %s89, %s92
      %p98 = scmp.eq.s32.totalorder %s11, 0
      %p99 = por %p97, %p98
      %p100 = scmp.ne.s32.totalorder %s89, %s92
      %p101 = scmp.eq.s32.totalorder %s16, 1
      %p102 = por %p100, %p101
      %p103 = scmp.ne.s32.totalorder %s92, %s93
      %p104 = scmp.eq.s32.totalorder %s16, 0
      %p105 = por %p103, %p104
      %p106 = scmp.ne.s32.totalorder %s92, %s93
      %p107 = scmp.eq.s32.totalorder %s17, 1
      %p108 = por %p106, %p107
      %p110 = scmp.ne.s32.totalorder %s93, %s109
      %p111 = scmp.eq.s32.totalorder %s17, 0
      %p112 = por %p110, %p111
      %p113 = scmp.le.s32.totalorder 1, %s11
      %p114 = scmp.lt.s32.totalorder %s11, 3
      %p115 = pnand %p113, %p114
      %p116 = pneg %p115
      // Predicated region
      $region9: #{tpu_custom_call.1} parent=5 // pred_check
        _
      $region10: #{tpu_custom_call.1} parent=5 // pred_check_branch
        %118 = sbr.rel (%p115) target = $region12
      $region11: #{tpu_custom_call.1} parent=5 // pred_region
        %s119 = ssub.s32 %s11, 1
        // Predicated region
        $region13: #{tpu_custom_call.1} parent=11 // pred_check
          %p120 = pneg %p32
        $region14: #{tpu_custom_call.1} parent=11 // pred_check_branch
          %122 = sbr.rel (%p120) target = $region16
        $region15: #{tpu_custom_call.1} parent=11 // pred_region
          %s124 = ssub.s32 16, 16
          %125 = vsyncadd [#allocation3], %s124
          %s127 = sshll.u32 %s0, 4
          %s128 = int_to_ptr.vmem [resolvable:$true] %s127
          %130 = dma.vmem_to_smem %s128, 16, [#allocation2], [#allocation3]
        $region16: #{tpu_custom_call.1} parent=11 // pred_fallthru
          _
        // Predicated region
        $region17: #{tpu_custom_call.1} parent=11 // pred_check
          %p131 = pneg %p53
        $region18: #{tpu_custom_call.1} parent=11 // pred_check_branch
          %133 = sbr.rel (%p131) target = $region20
        $region19: #{tpu_custom_call.1} parent=11 // pred_region
          %s135 = ssub.s32 16, 16
          %136 = vsyncadd [#allocation5], %s135
          %s138 = sshll.u32 %s1, 4
          %s139 = int_to_ptr.vmem [resolvable:$true] %s138
          %141 = dma.vmem_to_smem %s139, 16, [#allocation4], [#allocation5]
        $region20: #{tpu_custom_call.1} parent=11 // pred_fallthru
          _
      $region12: #{tpu_custom_call.1} parent=5 // pred_fallthru
        _
      %p142 = scmp.lt.s32.totalorder %s11, 2
      // Predicated region
      $region21: #{tpu_custom_call.1} parent=5 // pred_check
        %p143 = pneg %p142
      $region22: #{tpu_custom_call.1} parent=5 // pred_check_branch
        %145 = sbr.rel (%p143) target = $region24
      $region23: #{tpu_custom_call.1} parent=5 // pred_region
        // Predicated region
        $region25: #{tpu_custom_call.1} parent=23 // pred_check
          %p146 = pneg %p73
        $region26: #{tpu_custom_call.1} parent=23 // pred_check_branch
          %148 = sbr.rel (%p146) target = $region28
        $region27: #{tpu_custom_call.1} parent=23 // pred_region
          %s149 = sand.u32 %s63, 1
          %s150 = sand.u32 %s63, 1
          %s151 = smul.addr %s150, 192
          %s152 = scalar_lea.vmem [#allocation6], %s151
          %s153 = smul.u32 2, %s11
          %s154 = smul.addr %s153, 6
          %s155 = smul.addr %s154, 8
          %s156 = scalar_lea.vmem %s2, %s155
          // Predicated region
          $region29: #{tpu_custom_call.1} parent=27 // pred_check
            _
          $region30: #{tpu_custom_call.1} parent=27 // pred_check_branch
            %158 = sbr.rel (0) target = $region32
          $region31: #{tpu_custom_call.1} parent=27 // pred_region
            // Predicated region
            $region33: #{tpu_custom_call.1} parent=31 // pred_check
              _
            $region34: #{tpu_custom_call.1} parent=31 // pred_check_branch
              %160 = sbr.rel (0) target = $region36
            $region35: #{tpu_custom_call.1} parent=31 // pred_region
              loop: start=0, step=1, limit=1
              $region37: #{tpu_custom_call.1} parent=35 // loop_pre_header
                _
              $region38: #{tpu_custom_call.1} parent=35 // loop_header
                %s162 = sphi 0, %s166
                %p163 = scmp.ge.s32.totalorder %s162, 1
                %s167 = sphi %s156, %s156
                %s168 = sphi %s152, %s152
              $region39: #{tpu_custom_call.1} parent=35 // loop_header_branch
                %165 = sbr.rel (%p163) target = $region43
              $region40: #{tpu_custom_call.1} parent=35 // loop_body
                %v169 = vld [vmem:[%s167] sm:$0xff]
                %170 = vst [vmem:[%s168] sm:$0xff] %v169
                %v171 = vld [vmem:[%s167 + $0x8] sm:$0xff]
                %172 = vst [vmem:[%s168 + $0x8] sm:$0xff] %v171
                %v173 = vld [vmem:[%s167 + $0x10] sm:$0xff]
                %174 = vst [vmem:[%s168 + $0x10] sm:$0xff] %v173
                %v175 = vld [vmem:[%s167 + $0x18] sm:$0xff]
                %176 = vst [vmem:[%s168 + $0x18] sm:$0xff] %v175
                %v177 = vld [vmem:[%s167 + $0x20] sm:$0xff]
                %178 = vst [vmem:[%s168 + $0x20] sm:$0xff] %v177
                %v179 = vld [vmem:[%s167 + $0x28] sm:$0xff]
                %180 = vst [vmem:[%s168 + $0x28] sm:$0xff] %v179
                %v181 = vld [vmem:[%s167 + $0x30] sm:$0xff]
                %182 = vst [vmem:[%s168 + $0x30] sm:$0xff] %v181
                %v183 = vld [vmem:[%s167 + $0x38] sm:$0xff]
                %184 = vst [vmem:[%s168 + $0x38] sm:$0xff] %v183
                %v185 = vld [vmem:[%s167 + $0x40] sm:$0xff]
                %186 = vst [vmem:[%s168 + $0x40] sm:$0xff] %v185
                %v187 = vld [vmem:[%s167 + $0x48] sm:$0xff]
                %188 = vst [vmem:[%s168 + $0x48] sm:$0xff] %v187
                %v189 = vld [vmem:[%s167 + $0x50] sm:$0xff]
                %190 = vst [vmem:[%s168 + $0x50] sm:$0xff] %v189
                %v191 = vld [vmem:[%s167 + $0x58] sm:$0xff]
                %192 = vst [vmem:[%s168 + $0x58] sm:$0xff] %v191
                %v193 = vld [vmem:[%s167 + $0xc0] sm:$0xff]
                %194 = vst [vmem:[%s168 + $0x60] sm:$0xff] %v193
                %v195 = vld [vmem:[%s167 + $0xc8] sm:$0xff]
                %196 = vst [vmem:[%s168 + $0x68] sm:$0xff] %v195
                %v197 = vld [vmem:[%s167 + $0xd0] sm:$0xff]
                %198 = vst [vmem:[%s168 + $0x70] sm:$0xff] %v197
                %v199 = vld [vmem:[%s167 + $0xd8] sm:$0xff]
                %200 = vst [vmem:[%s168 + $0x78] sm:$0xff] %v199
                %v201 = vld [vmem:[%s167 + $0xe0] sm:$0xff]
                %202 = vst [vmem:[%s168 + $0x80] sm:$0xff] %v201
                %v203 = vld [vmem:[%s167 + $0xe8] sm:$0xff]
                %204 = vst [vmem:[%s168 + $0x88] sm:$0xff] %v203
                %v205 = vld [vmem:[%s167 + $0xf0] sm:$0xff]
                %206 = vst [vmem:[%s168 + $0x90] sm:$0xff] %v205
                %v207 = vld [vmem:[%s167 + $0xf8] sm:$0xff]
                %208 = vst [vmem:[%s168 + $0x98] sm:$0xff] %v207
                %v209 = vld [vmem:[%s167 + $0x100] sm:$0xff]
                %210 = vst [vmem:[%s168 + $0xa0] sm:$0xff] %v209
                %v211 = vld [vmem:[%s167 + $0x108] sm:$0xff]
                %212 = vst [vmem:[%s168 + $0xa8] sm:$0xff] %v211
                %v213 = vld [vmem:[%s167 + $0x110] sm:$0xff]
                %214 = vst [vmem:[%s168 + $0xb0] sm:$0xff] %v213
                %v215 = vld [vmem:[%s167 + $0x118] sm:$0xff]
                %216 = vst [vmem:[%s168 + $0xb8] sm:$0xff] %v215
              $region41: #{tpu_custom_call.1} parent=35 // loop_footer
                %s166 = sadd.s32 1, %s162
              $region42: #{tpu_custom_call.1} parent=35 // loop_footer_branch
                %161 = sbr.rel target = $region38
              $region43: #{tpu_custom_call.1} parent=35 // loop_exit
                _
            $region36: #{tpu_custom_call.1} parent=31 // pred_fallthru
              _
            // Predicated region
            $region44: #{tpu_custom_call.1} parent=31 // pred_check
              _
            $region45: #{tpu_custom_call.1} parent=31 // pred_check_branch
              %218 = sbr.rel target = $region47
            $region46: #{tpu_custom_call.1} parent=31 // pred_region
              _
            $region47: #{tpu_custom_call.1} parent=31 // pred_fallthru
              _
          $region32: #{tpu_custom_call.1} parent=27 // pred_fallthru
            _
          %219 = vnop
        $region28: #{tpu_custom_call.1} parent=23 // pred_fallthru
          _
      $region24: #{tpu_custom_call.1} parent=5 // pred_fallthru
        _
      %p220 = scmp.le.s32.totalorder 1, %s11
      %p221 = scmp.lt.s32.totalorder %s11, 3
      %p222 = pnand %p220, %p221
      %p223 = pneg %p222
      // Predicated region
      $region48: #{tpu_custom_call.1} parent=5 // pred_check
        _
      $region49: #{tpu_custom_call.1} parent=5 // pred_check_branch
        %225 = sbr.rel (%p222) target = $region51
      $region50: #{tpu_custom_call.1} parent=5 // pred_region
        %s226 = ssub.s32 %s11, 1
        // Predicated region
        $region52: #{tpu_custom_call.1} parent=50 // pred_check
          %p227 = pneg %p32
        $region53: #{tpu_custom_call.1} parent=50 // pred_check_branch
          %229 = sbr.rel (%p227) target = $region55
        $region54: #{tpu_custom_call.1} parent=50 // pred_region
          %230 = dma.done [#allocation3], 16
        $region55: #{tpu_custom_call.1} parent=50 // pred_fallthru
          _
        // Predicated region
        $region56: #{tpu_custom_call.1} parent=50 // pred_check
          %p231 = pneg %p53
        $region57: #{tpu_custom_call.1} parent=50 // pred_check_branch
          %233 = sbr.rel (%p231) target = $region59
        $region58: #{tpu_custom_call.1} parent=50 // pred_region
          %234 = dma.done [#allocation5], 16
        $region59: #{tpu_custom_call.1} parent=50 // pred_fallthru
          _
        %s235 = sand.u32 %s66, 1
        %s236 = sand.u32 %s66, 1
        %s237 = smul.addr %s236, 192
        %s238 = scalar_lea.vmem [#allocation6], %s237
        // Predicated region
        $region60: #{tpu_custom_call.1} parent=50 // pred_check
          %p239 = pneg %p79
        $region61: #{tpu_custom_call.1} parent=50 // pred_check_branch
          %241 = sbr.rel (%p239) target = $region63
        $region62: #{tpu_custom_call.1} parent=50 // pred_region
          _
        $region63: #{tpu_custom_call.1} parent=50 // pred_fallthru
          _
        %242 = sfence
        %p243 = pneg %p32
        %p244 = pneg %p29
        %p245 = pneg %p53
        %p246 = pneg %p50
        %s247 = sand.u32 %s66, 1
        %s248 = sand.u32 %s66, 1
        %s249 = smul.addr %s248, 192
        %s250 = scalar_lea.vmem [#allocation6], %s249
        %p251 = pneg %p79
        %p252 = pneg %p76
        %p253 = pneg %p105
        %p254 = pneg %p102
        %s255 = sand.u32 %s92, 1
        %s256 = sand.u32 %s92, 1
        %s257 = smul.addr %s256, 64
        %s258 = scalar_lea.vmem [#allocation7], %s257
        %s259 = smul.u32 2, %s16
        %s260 = smul.u32 2, %s16
        %s261 = smul.u32 %s16, 2
        %v262 = vld [vmem:[%s238] sm:$0x1f]
        %v263 = vld [vmem:[%s238 + $0x8] sm:$0x1f]
        %v264 = vld [vmem:[%s238 + $0x10] sm:$0x1f]
        %v265 = vld [vmem:[%s238 + $0x18] sm:$0x1f]
        %v266 = vld [vmem:[%s238 + $0x20] sm:$0x1f]
        %v267 = vld [vmem:[%s238 + $0x28] sm:$0x1f]
        %v268 = vld [vmem:[%s238 + $0x60] sm:$0x1f]
        %v269 = vld [vmem:[%s238 + $0x68] sm:$0x1f]
        %v270 = vld [vmem:[%s238 + $0x70] sm:$0x1f]
        %v271 = vld [vmem:[%s238 + $0x78] sm:$0x1f]
        %v272 = vld [vmem:[%s238 + $0x80] sm:$0x1f]
        %v273 = vld [vmem:[%s238 + $0x88] sm:$0x1f]
        %vm274 = vcmask 1044480
        %v275 = vsel %vm274, %v262, 0.0
        %v276 = vsel %vm274, %v264, 0.0
        %v277 = vadd.f32 %v275, %v276
        %v278 = vsel %vm274, %v266, 0.0
        %v279 = vadd.f32 %v277, %v278
        %v280 = vsel %vm274, %v263, 0.0
        %v281 = vsel %vm274, %v265, 0.0
        %v282 = vadd.f32 %v280, %v281
        %v283 = vsel %vm274, %v267, 0.0
        %v284 = vadd.f32 %v282, %v283
        %v285 = vsel %vm274, %v268, 0.0
        %v286 = vsel %vm274, %v270, 0.0
        %v287 = vadd.f32 %v285, %v286
        %v288 = vsel %vm274, %v272, 0.0
        %v289 = vadd.f32 %v287, %v288
        %v290 = vsel %vm274, %v269, 0.0
        %v291 = vsel %vm274, %v271, 0.0
        %v292 = vadd.f32 %v290, %v291
        %v293 = vsel %vm274, %v273, 0.0
        %v294 = vadd.f32 %v292, %v293
        %v295 = vrcp.pop 3.0
        %v296 = vmul.f32 %v279, %v295
        %v297 = vmul.f32 %v284, %v295
        %v298 = vmul.f32 %v289, %v295
        %v299 = vmul.f32 %v294, %v295
        %v300 = vsel %vm274, %v296, 0.0
        %v301 = vsel %vm274, %v297, 0.0
        %v302 = vadd.f32 %v300, %v301
        %v303 = vsel %vm274, %v298, 0.0
        %v304 = vadd.f32 %v302, %v303
        %v305 = vsel %vm274, %v299, 0.0
        %v306 = vadd.f32 %v304, %v305
        %307 = vadd.xlane.f32.xlu0 %v306
        %v308 = vpop.xlane.xlu0 %307
        %v309 = vrot.slane %v308, 4
        %v310 = vadd.f32 %v308, %v309
        %v311 = vrot.slane %v310, 2
        %v312 = vadd.f32 %v310, %v311
        %v313 = vrot.slane %v312, 1
        %v314 = vadd.f32 %v312, %v313
        %s315 = vtos %v314
        %v316 = vrcp.pop 2560.0
        %s317 = vtos %v316
        %s318 = smul.f32 %s315, %s317
        %v319 = vstv %s318
        %v320 = vsub.f32 %v296, %v319
        %v321 = vsub.f32 %v297, %v319
        %v322 = vsub.f32 %v298, %v319
        %v323 = vsub.f32 %v299, %v319
        %v324 = vmul.f32 %v320, %v320
        %v325 = vmul.f32 %v321, %v321
        %v326 = vmul.f32 %v322, %v322
        %v327 = vmul.f32 %v323, %v323
        %v328 = vsel %vm274, %v324, 0.0
        %v329 = vsel %vm274, %v325, 0.0
        %v330 = vadd.f32 %v328, %v329
        %v331 = vsel %vm274, %v326, 0.0
        %v332 = vadd.f32 %v330, %v331
        %v333 = vsel %vm274, %v327, 0.0
        %v334 = vadd.f32 %v332, %v333
        %335 = vadd.xlane.f32.xlu0 %v334
        %v336 = vpop.xlane.xlu0 %335
        %v337 = vrot.slane %v336, 4
        %v338 = vadd.f32 %v336, %v337
        %v339 = vrot.slane %v338, 2
        %v340 = vadd.f32 %v338, %v339
        %v341 = vrot.slane %v340, 1
        %v342 = vadd.f32 %v340, %v341
        %s343 = vtos %v342
        %v344 = vrcp.pop 2560.0
        %s345 = vtos %v344
        %s346 = smul.f32 %s343, %s345
        %s347 = sld [smem:[#allocation2 + %s261]]
        %s348 = sadd.f32 %s346, 1e-05
        %v349 = vstv %s348
        %v350 = vrsqrt.pop %v349
        %s351 = vtos %v350
        %s352 = smul.f32 %s347, %s351
        %s353 = sld [smem:[#allocation4 + %s261]]
        %s354 = smul.f32 %s318, %s352
        %s355 = ssub.f32 %s353, %s354
        %v356 = vstv %s352
        %v357 = vmul.f32 %v296, %v356
        %v358 = vmul.f32 %v297, %v356
        %v359 = vmul.f32 %v298, %v356
        %v360 = vmul.f32 %v299, %v356
        %v361 = vstv %s355
        %v362 = vadd.f32 %v357, %v361
        %v363 = vadd.f32 %v358, %v361
        %v364 = vadd.f32 %v359, %v361
        %v365 = vadd.f32 %v360, %v361
        %366 = vst [vmem:[%s258] sm:$0x1f] %v362
        %367 = vst [vmem:[%s258 + $0x8] sm:$0x1f] %v363
        %368 = vst [vmem:[%s258 + $0x20] sm:$0x1f] %v364
        %369 = vst [vmem:[%s258 + $0x28] sm:$0x1f] %v365
        %s370 = scalar_lea.vmem %s238, 48 [#allocation6]
        %v371 = vld [vmem:[%s370] sm:$0x1f]
        %v372 = vld [vmem:[%s370 + $0x8] sm:$0x1f]
        %v373 = vld [vmem:[%s370 + $0x10] sm:$0x1f]
        %v374 = vld [vmem:[%s370 + $0x18] sm:$0x1f]
        %v375 = vld [vmem:[%s370 + $0x20] sm:$0x1f]
        %v376 = vld [vmem:[%s370 + $0x28] sm:$0x1f]
        %v377 = vld [vmem:[%s370 + $0x60] sm:$0x1f]
        %v378 = vld [vmem:[%s370 + $0x68] sm:$0x1f]
        %v379 = vld [vmem:[%s370 + $0x70] sm:$0x1f]
        %v380 = vld [vmem:[%s370 + $0x78] sm:$0x1f]
        %v381 = vld [vmem:[%s370 + $0x80] sm:$0x1f]
        %v382 = vld [vmem:[%s370 + $0x88] sm:$0x1f]
        %v383 = vsel %vm274, %v371, 0.0
        %v384 = vsel %vm274, %v373, 0.0
        %v385 = vadd.f32 %v383, %v384
        %v386 = vsel %vm274, %v375, 0.0
        %v387 = vadd.f32 %v385, %v386
        %v388 = vsel %vm274, %v372, 0.0
        %v389 = vsel %vm274, %v374, 0.0
        %v390 = vadd.f32 %v388, %v389
        %v391 = vsel %vm274, %v376, 0.0
        %v392 = vadd.f32 %v390, %v391
        %v393 = vsel %vm274, %v377, 0.0
        %v394 = vsel %vm274, %v379, 0.0
        %v395 = vadd.f32 %v393, %v394
        %v396 = vsel %vm274, %v381, 0.0
        %v397 = vadd.f32 %v395, %v396
        %v398 = vsel %vm274, %v378, 0.0
        %v399 = vsel %vm274, %v380, 0.0
        %v400 = vadd.f32 %v398, %v399
        %v401 = vsel %vm274, %v382, 0.0
        %v402 = vadd.f32 %v400, %v401
        %v403 = vmul.f32 %v387, %v295
        %v404 = vmul.f32 %v392, %v295
        %v405 = vmul.f32 %v397, %v295
        %v406 = vmul.f32 %v402, %v295
        %v407 = vsel %vm274, %v403, 0.0
        %v408 = vsel %vm274, %v404, 0.0
        %v409 = vadd.f32 %v407, %v408
        %v410 = vsel %vm274, %v405, 0.0
        %v411 = vadd.f32 %v409, %v410
        %v412 = vsel %vm274, %v406, 0.0
        %v413 = vadd.f32 %v411, %v412
        %414 = vadd.xlane.f32.xlu0 %v413
        %v415 = vpop.xlane.xlu0 %414
        %v416 = vrot.slane %v415, 4
        %v417 = vadd.f32 %v415, %v416
        %v418 = vrot.slane %v417, 2
        %v419 = vadd.f32 %v417, %v418
        %v420 = vrot.slane %v419, 1
        %v421 = vadd.f32 %v419, %v420
        %s422 = vtos %v421
        %v423 = vrcp.pop 2560.0
        %s424 = vtos %v423
        %s425 = smul.f32 %s422, %s424
        %v426 = vstv %s425
        %v427 = vsub.f32 %v403, %v426
        %v428 = vsub.f32 %v404, %v426
        %v429 = vsub.f32 %v405, %v426
        %v430 = vsub.f32 %v406, %v426
        %v431 = vmul.f32 %v427, %v427
        %v432 = vmul.f32 %v428, %v428
        %v433 = vmul.f32 %v429, %v429
        %v434 = vmul.f32 %v430, %v430
        %v435 = vsel %vm274, %v431, 0.0
        %v436 = vsel %vm274, %v432, 0.0
        %v437 = vadd.f32 %v435, %v436
        %v438 = vsel %vm274, %v433, 0.0
        %v439 = vadd.f32 %v437, %v438
        %v440 = vsel %vm274, %v434, 0.0
        %v441 = vadd.f32 %v439, %v440
        %442 = vadd.xlane.f32.xlu0 %v441
        %v443 = vpop.xlane.xlu0 %442
        %v444 = vrot.slane %v443, 4
        %v445 = vadd.f32 %v443, %v444
        %v446 = vrot.slane %v445, 2
        %v447 = vadd.f32 %v445, %v446
        %v448 = vrot.slane %v447, 1
        %v449 = vadd.f32 %v447, %v448
        %s450 = vtos %v449
        %v451 = vrcp.pop 2560.0
        %s452 = vtos %v451
        %s453 = smul.f32 %s450, %s452
        %s454 = sadd.s32 %s261, 1
        %s455 = sld [smem:[#allocation2 + %s454]]
        %s456 = sadd.f32 %s453, 1e-05
        %v457 = vstv %s456
        %v458 = vrsqrt.pop %v457
        %s459 = vtos %v458
        %s460 = smul.f32 %s455, %s459
        %s461 = sld [smem:[#allocation4 + %s454]]
        %s462 = smul.f32 %s425, %s460
        %s463 = ssub.f32 %s461, %s462
        %v464 = vstv %s460
        %v465 = vmul.f32 %v403, %v464
        %v466 = vmul.f32 %v404, %v464
        %v467 = vmul.f32 %v405, %v464
        %v468 = vmul.f32 %v406, %v464
        %v469 = vstv %s463
        %v470 = vadd.f32 %v465, %v469
        %v471 = vadd.f32 %v466, %v469
        %v472 = vadd.f32 %v467, %v469
        %v473 = vadd.f32 %v468, %v469
        %s474 = scalar_lea.vmem %s258, 16 [#allocation7]
        %475 = vst [vmem:[%s474] sm:$0x1f] %v470
        %476 = vst [vmem:[%s474 + $0x8] sm:$0x1f] %v471
        %477 = vst [vmem:[%s474 + $0x20] sm:$0x1f] %v472
        %478 = vst [vmem:[%s474 + $0x28] sm:$0x1f] %v473
        %s479 = sand.u32 %s92, 1
        %s480 = sand.u32 %s92, 1
        %s481 = smul.addr %s480, 64
        %s482 = scalar_lea.vmem [#allocation7], %s481
        // Predicated region
        $region64: #{tpu_custom_call.1} parent=50 // pred_check
          %p483 = pneg %p102
        $region65: #{tpu_custom_call.1} parent=50 // pred_check_branch
          %485 = sbr.rel (%p483) target = $region67
        $region66: #{tpu_custom_call.1} parent=50 // pred_region
          %s486 = smul.u32 2, %s16
          %s487 = smul.addr %s486, 2
          %s488 = smul.addr %s487, 8
          %s489 = scalar_lea.vmem %s3, %s488
          // Predicated region
          $region68: #{tpu_custom_call.1} parent=66 // pred_check
            _
          $region69: #{tpu_custom_call.1} parent=66 // pred_check_branch
            %491 = sbr.rel (0) target = $region71
          $region70: #{tpu_custom_call.1} parent=66 // pred_region
            // Predicated region
            $region72: #{tpu_custom_call.1} parent=70 // pred_check
              _
            $region73: #{tpu_custom_call.1} parent=70 // pred_check_branch
              %493 = sbr.rel (0) target = $region75
            $region74: #{tpu_custom_call.1} parent=70 // pred_region
              loop: start=0, step=1, limit=1
              $region76: #{tpu_custom_call.1} parent=74 // loop_pre_header
                _
              $region77: #{tpu_custom_call.1} parent=74 // loop_header
                %s495 = sphi 0, %s499
                %p496 = scmp.ge.s32.totalorder %s495, 1
                %s500 = sphi %s482, %s482
                %s501 = sphi %s489, %s489
              $region78: #{tpu_custom_call.1} parent=74 // loop_header_branch
                %498 = sbr.rel (%p496) target = $region82
              $region79: #{tpu_custom_call.1} parent=74 // loop_body
                %v502 = vld [vmem:[%s500] sm:$0xff]
                %503 = vst [vmem:[%s501] sm:$0xff] %v502
                %v504 = vld [vmem:[%s500 + $0x8] sm:$0xff]
                %505 = vst [vmem:[%s501 + $0x8] sm:$0xff] %v504
                %v506 = vld [vmem:[%s500 + $0x10] sm:$0xff]
                %507 = vst [vmem:[%s501 + $0x10] sm:$0xff] %v506
                %v508 = vld [vmem:[%s500 + $0x18] sm:$0xff]
                %509 = vst [vmem:[%s501 + $0x18] sm:$0xff] %v508
                %v510 = vld [vmem:[%s500 + $0x20] sm:$0xff]
                %511 = vst [vmem:[%s501 + $0x40] sm:$0xff] %v510
                %v512 = vld [vmem:[%s500 + $0x28] sm:$0xff]
                %513 = vst [vmem:[%s501 + $0x48] sm:$0xff] %v512
                %v514 = vld [vmem:[%s500 + $0x30] sm:$0xff]
                %515 = vst [vmem:[%s501 + $0x50] sm:$0xff] %v514
                %v516 = vld [vmem:[%s500 + $0x38] sm:$0xff]
                %517 = vst [vmem:[%s501 + $0x58] sm:$0xff] %v516
              $region80: #{tpu_custom_call.1} parent=74 // loop_footer
                %s499 = sadd.s32 1, %s495
              $region81: #{tpu_custom_call.1} parent=74 // loop_footer_branch
                %494 = sbr.rel target = $region77
              $region82: #{tpu_custom_call.1} parent=74 // loop_exit
                _
            $region75: #{tpu_custom_call.1} parent=70 // pred_fallthru
              _
            // Predicated region
            $region83: #{tpu_custom_call.1} parent=70 // pred_check
              _
            $region84: #{tpu_custom_call.1} parent=70 // pred_check_branch
              %519 = sbr.rel target = $region86
            $region85: #{tpu_custom_call.1} parent=70 // pred_region
              _
            $region86: #{tpu_custom_call.1} parent=70 // pred_fallthru
              _
          $region71: #{tpu_custom_call.1} parent=66 // pred_fallthru
            _
          %520 = vnop
        $region67: #{tpu_custom_call.1} parent=50 // pred_fallthru
          _
      $region51: #{tpu_custom_call.1} parent=5 // pred_fallthru
        _
      %p521 = scmp.le.s32.totalorder 2, %s11
      // Predicated region
      $region87: #{tpu_custom_call.1} parent=5 // pred_check
        %p522 = pneg %p521
      $region88: #{tpu_custom_call.1} parent=5 // pred_check_branch
        %524 = sbr.rel (%p522) target = $region90
      $region89: #{tpu_custom_call.1} parent=5 // pred_region
        %s525 = ssub.s32 %s11, 2
        // Predicated region
        $region91: #{tpu_custom_call.1} parent=89 // pred_check
          %p526 = pneg %p108
        $region92: #{tpu_custom_call.1} parent=89 // pred_check_branch
          %528 = sbr.rel (%p526) target = $region94
        $region93: #{tpu_custom_call.1} parent=89 // pred_region
          %s529 = sand.u32 %s93, 1
          %s530 = sand.u32 %s93, 1
          %s531 = smul.addr %s530, 64
          %s532 = scalar_lea.vmem [#allocation7], %s531
        $region94: #{tpu_custom_call.1} parent=89 // pred_fallthru
          _
      $region90: #{tpu_custom_call.1} parent=5 // pred_fallthru
        _
    $region6: #{tpu_custom_call.1} parent=1 // loop_footer
      %s15 = sadd.s32 1, %s11
    $region7: #{tpu_custom_call.1} parent=1 // loop_footer_branch
      %10 = sbr.rel target = $region3
    $region8: #{tpu_custom_call.1} parent=1 // loop_exit
      _
    %533 = vsyncpa [#allocation3], 1
    %s534 = scalar_lea.sflag [#allocation3], 1
    %535 = vsyncpa %s534, 1
    %536 = vsyncpa [#allocation5], 1

</llo_original>
